<compile_context>
chip_gen: v7x
topology: tpu7x:2x2x1
jax: 0.10.0
libtpu: 0.0.40
codegen_flags: <defaults>
</compile_context>

<pallas_src>
import jax
import jax.numpy as jnp
from jax import lax
from jax.experimental import pallas as pl
from jax.experimental.pallas import tpu as pltpu


def _decoder_pos_kernel(gamma_ref,        # SMEM (1,)           f32
                        x_ref, xe_ref,    # (1, C, N) each      f32
                        wq_ref,           # (C8, C)             bf16
                        bq_ref,           # (C8, 1)             f32
                        wvk_ref,          # (C + C8, C)         bf16  [wv rows; wk rows]
                        bvk_ref,          # (C + C8, 1)         f32
                        pos_ref,          # (C8, N)             f32
                        out_ref,          # (1, C, N)           f32
                        attn_ref):        # (1, N, N)           f32
    C = x_ref.shape[1]

    x = x_ref[0]                               # [C, N] f32 — kept exact for the residual
    x_b = x.astype(jnp.bfloat16)
    xe_b = xe_ref[0].astype(jnp.bfloat16)      # [C, N]

    # 1x1 convs == channels-first matmuls W @ X (N on the lane axis; bf16 in / f32 acc).
    qT = jnp.dot(wq_ref[...], x_b, preferred_element_type=jnp.float32) + bq_ref[...]      # [C8, N]
    vkT = jnp.dot(wvk_ref[...], xe_b, preferred_element_type=jnp.float32) + bvk_ref[...]  # [C+C8, N]
    vT = vkT[:C, :]                            # [C, N]   (value rows first -> aligned slice)
    kT = vkT[C:, :] + pos_ref[...]             # [C8, N]  positional bias folded into k

    # energy[i, j] = sum_c qT[c, i] * kT[c, j]   ('TN' dot: contract leading dim of both;
    # K = C/8 is tiny, so this matmul stays f32 for softmax accuracy).
    energy = lax.dot_general(qT, kT, (((0,), (0,)), ((), ())),
                             preferred_element_type=jnp.float32)                           # [N, N]

    # softmax over keys (last axis); divide moved to the EUP via approximate reciprocal.
    m = jnp.max(energy, axis=-1, keepdims=True)
    e = jnp.exp(energy - m)
    s = jnp.sum(e, axis=-1, keepdims=True)
    attn = e * pl.reciprocal(s, approx=True)                                               # [N, N]

    # out[c, i] = sum_j vT[c, j] * attn[i, j]   ('NT' dot; bf16 in / f32 acc).
    out = lax.dot_general(vT.astype(jnp.bfloat16), attn.astype(jnp.bfloat16),
                          (((1,), (1,)), ((), ())),
                          preferred_element_type=jnp.float32)                              # [C, N]

    out_ref[0] = gamma_ref[0] * out + x
    attn_ref[0] = attn


def decoder_pos_forward(x, x_encoder, params):
    """x, x_encoder: [B, C, W, H] float32 (NCHW).  Returns (out NCHW, attention [B, N, N])."""
    B, C, W, H = x.shape
    N = W * H
    C8 = C // 8

    # ---- glue: channels-first flatten is a pure reshape (== .view(B, C, W*H)); no transposes ----
    x_cf = x.reshape(B, C, N)
    xe_cf = x_encoder.reshape(B, C, N)

    wq = params["wq"][:, :, 0, 0].astype(jnp.bfloat16)                       # [C8, C]
    wvk = jnp.concatenate([params["wv"][:, :, 0, 0],                         # value rows first
                           params["wk"][:, :, 0, 0]], axis=0).astype(jnp.bfloat16)  # [C+C8, C]
    bq = params["bq"].reshape(C8, 1).astype(jnp.float32)
    bvk = jnp.concatenate([params["bv"], params["bk"]]).reshape(C + C8, 1).astype(jnp.float32)
    # (rel_h + rel_w).view(1, C8, -1): H-outer/W-inner flatten, faithfully mirroring PyTorch
    # (even though x itself is flattened W-outer/H-inner — same quirk as the source module).
    pos = (params["rel_h"] + params["rel_w"]).reshape(C8, H * W).astype(jnp.float32)
    gamma = params["gamma"].reshape(1).astype(jnp.float32)

    kernel = pl.pallas_call(
        _decoder_pos_kernel,
        grid=(B,),
        in_specs=[
            pl.BlockSpec(memory_space=pltpu.MemorySpace.SMEM),      # gamma scalar
            pl.BlockSpec((1, C, N), lambda b: (b, 0, 0)),           # x        (channels-first)
            pl.BlockSpec((1, C, N), lambda b: (b, 0, 0)),           # x_encoder
            pl.BlockSpec((C8, C), lambda b: (0, 0)),                # wq
            pl.BlockSpec((C8, 1), lambda b: (0, 0)),                # bq
            pl.BlockSpec((C + C8, C), lambda b: (0, 0)),            # fused [wv; wk]
            pl.BlockSpec((C + C8, 1), lambda b: (0, 0)),            # fused [bv; bk]
            pl.BlockSpec((C8, N), lambda b: (0, 0)),                # positional bias
        ],
        out_specs=[
            pl.BlockSpec((1, C, N), lambda b: (b, 0, 0)),           # out (channels-first)
            pl.BlockSpec((1, N, N), lambda b: (b, 0, 0)),           # attention
        ],
        out_shape=[
            jax.ShapeDtypeStruct((B, C, N), jnp.float32),
            jax.ShapeDtypeStruct((B, N, N), jnp.float32),
        ],
        compiler_params=pltpu.CompilerParams(
            dimension_semantics=("parallel",),      # batch -> both TCs on v7x
            vmem_limit_bytes=32 * 1024 * 1024,
        ),
    )

    out_cf, attn = kernel(gamma, x_cf, xe_cf, wq, bq, wvk, bvk, pos)
    out = out_cf.reshape(B, C, W, H)   # pure reshape back to NCHW (no transpose)
    return out, attn


# -------- pure-JAX reference (mirrors the PyTorch forward exactly, NCHW, f32) --------
def decoder_pos_reference(x, xe, params):
    B, C, W, H = x.shape
    C8 = C // 8
    N = W * H

    def conv1x1(inp, w, b):
        return jnp.einsum("bcwh,oc->bowh", inp, w[:, :, 0, 0]) + b[None, :, None, None]

    pq = conv1x1(x, params["wq"], params["bq"]).reshape(B, C8, N).transpose(0, 2, 1)  # [B,N,C8]
    pk = conv1x1(xe, params["wk"], params["bk"]).reshape(B, C8, N)                    # [B,C8,N]
    energy_content = jnp.einsum("bnc,bcm->bnm", pq, pk)
    content_position = (params["rel_h"] + params["rel_w"]).reshape(1, C8, -1)
    content_position = jnp.einsum("bnc,xcm->bnm", pq, content_position)
    energy = energy_content + content_position
    attention = jax.nn.softmax(energy, axis=-1)
    pv = conv1x1(xe, params["wv"], params["bv"]).reshape(B, C, N)
    out = jnp.einsum("bcj,bij->bci", pv, attention).reshape(B, C, W, H)
    out = params["gamma"].reshape(()) * out + x
    return out, attention


if __name__ == "__main__":
    B, C, W, H = 2, 32, 8, 8            # n_dims=32 -> C//8 = 4; N = 64
    C8 = C // 8

    key = jax.random.PRNGKey(0)
    ks = jax.random.split(key, 10)
    params = {
        "wq": 0.1 * jax.random.normal(ks[0], (C8, C, 1, 1), jnp.float32),
        "bq": 0.1 * jax.random.normal(ks[1], (C8,), jnp.float32),
        "wk": 0.1 * jax.random.normal(ks[2], (C8, C, 1, 1), jnp.float32),
        "bk": 0.1 * jax.random.normal(ks[3], (C8,), jnp.float32),
        "wv": 0.1 * jax.random.normal(ks[4], (C, C, 1, 1), jnp.float32),
        "bv": 0.1 * jax.random.normal(ks[5], (C,), jnp.float32),
        "rel_h": jax.random.normal(ks[6], (1, C8, H, 1), jnp.float32),
        "rel_w": jax.random.normal(ks[7], (1, C8, 1, W), jnp.float32),
        # The module zero-initialises gamma; use a non-zero value here so the
        # gamma*out + x path is actually exercised by the check.
        "gamma": jnp.full((1,), 0.5, jnp.float32),
    }
    x = jax.random.normal(ks[8], (B, C, W, H), jnp.float32)
    x_encoder = jax.random.normal(ks[9], (B, C, W, H), jnp.float32)

    out, attn = decoder_pos_forward(x, x_encoder, params)
    out = jax.block_until_ready(out)
    attn = jax.block_until_ready(attn)

    out_ref, attn_ref = decoder_pos_reference(x, x_encoder, params)
    assert out.shape == (B, C, W, H) and attn.shape == (B, W * H, W * H)
    # bf16 MXU operands + approximate reciprocal -> looser tolerance than pure-f32.
    assert jnp.allclose(attn, attn_ref, rtol=3e-2, atol=5e-3), \
        float(jnp.max(jnp.abs(attn - attn_ref)))
    assert jnp.allclose(out, out_ref, rtol=3e-2, atol=1e-2), \
        float(jnp.max(jnp.abs(out - out_ref)))

    print("KERNEL_OK")
</pallas_src>

<mosaic_0001>
module attributes {stable_mosaic.version = 11 : i64} {
  func.func @_decoder_pos_kernel(%arg0: i32, %arg1: memref<1xf32, #tpu.memory_space<smem>>, %arg2: memref<1x32x64xf32, #tpu.memory_space<vmem>>, %arg3: memref<1x32x64xf32, #tpu.memory_space<vmem>>, %arg4: memref<4x32xbf16, #tpu.memory_space<vmem>>, %arg5: memref<4x1xf32, #tpu.memory_space<vmem>>, %arg6: memref<36x32xbf16, #tpu.memory_space<vmem>>, %arg7: memref<36x1xf32, #tpu.memory_space<vmem>>, %arg8: memref<4x64xf32, #tpu.memory_space<vmem>>, %arg9: memref<1x32x64xf32, #tpu.memory_space<vmem>>, %arg10: memref<1x64x64xf32, #tpu.memory_space<vmem>>) attributes {dimension_semantics = [#tpu.dimension_semantics<parallel>], iteration_bounds = array<i64: 2>, scalar_prefetch = 0 : i64, scratch_operands = 0 : i64, tpu.core_type = #tpu.core_type<tc>, window_params = [{transform_indices = @transform_0, window_bounds = array<i64: 1>}, {transform_indices = @transform_1, window_bounds = array<i64: 1, 32, 64>}, {transform_indices = @transform_2, window_bounds = array<i64: 1, 32, 64>}, {pipeline_mode = #tpu.pipeline_mode<synchronous>, transform_indices = @transform_3, window_bounds = array<i64: 4, 32>}, {pipeline_mode = #tpu.pipeline_mode<synchronous>, transform_indices = @transform_4, window_bounds = array<i64: 4, 1>}, {pipeline_mode = #tpu.pipeline_mode<synchronous>, transform_indices = @transform_5, window_bounds = array<i64: 36, 32>}, {pipeline_mode = #tpu.pipeline_mode<synchronous>, transform_indices = @transform_6, window_bounds = array<i64: 36, 1>}, {pipeline_mode = #tpu.pipeline_mode<synchronous>, transform_indices = @transform_7, window_bounds = array<i64: 4, 64>}, {transform_indices = @transform_8, window_bounds = array<i64: 1, 32, 64>}, {transform_indices = @transform_9, window_bounds = array<i64: 1, 64, 64>}]} {
    %c0 = arith.constant 0 : index
    %c0_0 = arith.constant 0 : index
    %c0_1 = arith.constant 0 : index
    %0 = vector.load %arg2[%c0, %c0_0, %c0_1] : memref<1x32x64xf32, #tpu.memory_space<vmem>>, vector<1x32x64xf32>
    %1 = vector.shape_cast %0 : vector<1x32x64xf32> to vector<32x64xf32>
    %2 = arith.truncf %1 : vector<32x64xf32> to vector<32x64xbf16>
    %c0_2 = arith.constant 0 : index
    %c0_3 = arith.constant 0 : index
    %c0_4 = arith.constant 0 : index
    %3 = vector.load %arg3[%c0_2, %c0_3, %c0_4] : memref<1x32x64xf32, #tpu.memory_space<vmem>>, vector<1x32x64xf32>
    %4 = vector.shape_cast %3 : vector<1x32x64xf32> to vector<32x64xf32>
    %5 = arith.truncf %4 : vector<32x64xf32> to vector<32x64xbf16>
    %c0_5 = arith.constant 0 : index
    %c0_6 = arith.constant 0 : index
    %6 = vector.load %arg4[%c0_5, %c0_6] : memref<4x32xbf16, #tpu.memory_space<vmem>>, vector<4x32xbf16>
    %cst = arith.constant dense<0.000000e+00> : vector<4x64xf32>
    %7 = tpu.matmul %6, %2, %cst {dimension_numbers = #tpu.dot_dimension_numbers<[1], [0], [0], [1], [0, 0, 1, 1], [], []>} : vector<4x32xbf16>, vector<32x64xbf16>, vector<4x64xf32> -> vector<4x64xf32>
    %c0_7 = arith.constant 0 : index
    %c0_8 = arith.constant 0 : index
    %8 = vector.load %arg5[%c0_7, %c0_8] : memref<4x1xf32, #tpu.memory_space<vmem>>, vector<4x1xf32>
    %9 = vector.broadcast %8 : vector<4x1xf32> to vector<4x64xf32>
    %10 = arith.addf %7, %9 : vector<4x64xf32>
    %c0_9 = arith.constant 0 : index
    %c0_10 = arith.constant 0 : index
    %11 = vector.load %arg6[%c0_9, %c0_10] : memref<36x32xbf16, #tpu.memory_space<vmem>>, vector<36x32xbf16>
    %cst_11 = arith.constant dense<0.000000e+00> : vector<36x64xf32>
    %12 = tpu.matmul %11, %5, %cst_11 {dimension_numbers = #tpu.dot_dimension_numbers<[1], [0], [0], [1], [0, 0, 1, 1], [], []>} : vector<36x32xbf16>, vector<32x64xbf16>, vector<36x64xf32> -> vector<36x64xf32>
    %c0_12 = arith.constant 0 : index
    %c0_13 = arith.constant 0 : index
    %13 = vector.load %arg7[%c0_12, %c0_13] : memref<36x1xf32, #tpu.memory_space<vmem>>, vector<36x1xf32>
    %14 = vector.broadcast %13 : vector<36x1xf32> to vector<36x64xf32>
    %15 = arith.addf %12, %14 : vector<36x64xf32>
    %16 = vector.extract_strided_slice %15 {offsets = [0, 0], sizes = [32, 64], strides = [1, 1]} : vector<36x64xf32> to vector<32x64xf32>
    %17 = vector.extract_strided_slice %15 {offsets = [32, 0], sizes = [4, 64], strides = [1, 1]} : vector<36x64xf32> to vector<4x64xf32>
    %c0_14 = arith.constant 0 : index
    %c0_15 = arith.constant 0 : index
    %18 = vector.load %arg8[%c0_14, %c0_15] : memref<4x64xf32, #tpu.memory_space<vmem>>, vector<4x64xf32>
    %19 = arith.addf %17, %18 : vector<4x64xf32>
    %cst_16 = arith.constant dense<0.000000e+00> : vector<64x64xf32>
    %20 = tpu.matmul %10, %19, %cst_16 {dimension_numbers = #tpu.dot_dimension_numbers<[0], [0], [1], [1], [0, 1, 1, 1], [], []>} : vector<4x64xf32>, vector<4x64xf32>, vector<64x64xf32> -> vector<64x64xf32>
    %cst_17 = arith.constant dense<0xFF800000> : vector<64xf32>
    %21 = vector.multi_reduction <maximumf>, %20, %cst_17 [1] : vector<64x64xf32> to vector<64xf32>
    %22 = vector.shape_cast %21 : vector<64xf32> to vector<64x1xf32>
    %23 = vector.broadcast %22 : vector<64x1xf32> to vector<64x64xf32>
    %24 = arith.subf %20, %23 : vector<64x64xf32>
    %25 = math.exp %24 : vector<64x64xf32>
    %cst_18 = arith.constant dense<0.000000e+00> : vector<64xf32>
    %26 = vector.multi_reduction <add>, %25, %cst_18 [1] : vector<64x64xf32> to vector<64xf32>
    %27 = vector.shape_cast %26 : vector<64xf32> to vector<64x1xf32>
    %28 = tpu.reciprocal %27 {approx = true} : vector<64x1xf32> -> vector<64x1xf32>
    %29 = vector.broadcast %28 : vector<64x1xf32> to vector<64x64xf32>
    %30 = arith.mulf %25, %29 : vector<64x64xf32>
    %31 = arith.truncf %16 : vector<32x64xf32> to vector<32x64xbf16>
    %32 = arith.truncf %30 : vector<64x64xf32> to vector<64x64xbf16>
    %cst_19 = arith.constant dense<0.000000e+00> : vector<32x64xf32>
    %33 = tpu.matmul %31, %32, %cst_19 {dimension_numbers = #tpu.dot_dimension_numbers<[1], [1], [0], [0], [0, 0, 1, 0], [], []>} : vector<32x64xbf16>, vector<64x64xbf16>, vector<32x64xf32> -> vector<32x64xf32>
    %c0_20 = arith.constant 0 : index
    %34 = memref.load %arg1[%c0_20] : memref<1xf32, #tpu.memory_space<smem>>
    %35 = vector.broadcast %34 : f32 to vector<32x64xf32>
    %36 = arith.mulf %35, %33 : vector<32x64xf32>
    %37 = arith.addf %36, %1 : vector<32x64xf32>
    %c0_21 = arith.constant 0 : index
    %c0_22 = arith.constant 0 : index
    %c0_23 = arith.constant 0 : index
    %38 = vector.load %arg9[%c0_21, %c0_22, %c0_23] : memref<1x32x64xf32, #tpu.memory_space<vmem>>, vector<1x32x64xf32>
    %39 = vector.shape_cast %38 : vector<1x32x64xf32> to vector<32x64xf32>
    %40 = vector.shape_cast %37 : vector<32x64xf32> to vector<1x32x64xf32>
    tpu.vector_store %arg9[%c0_21, %c0_22, %c0_23], %40 {strides = array<i32>} : memref<1x32x64xf32, #tpu.memory_space<vmem>>, vector<1x32x64xf32>,
    %c0_24 = arith.constant 0 : index
    %c0_25 = arith.constant 0 : index
    %c0_26 = arith.constant 0 : index
    %41 = vector.load %arg10[%c0_24, %c0_25, %c0_26] : memref<1x64x64xf32, #tpu.memory_space<vmem>>, vector<1x64x64xf32>
    %42 = vector.shape_cast %41 : vector<1x64x64xf32> to vector<64x64xf32>
    %43 = vector.shape_cast %30 : vector<64x64xf32> to vector<1x64x64xf32>
    tpu.vector_store %arg10[%c0_24, %c0_25, %c0_26], %43 {strides = array<i32>} : memref<1x64x64xf32, #tpu.memory_space<vmem>>, vector<1x64x64xf32>,
    return
  }
  func.func @transform_0(%arg0: i32) -> i32 {
    %c0_i32 = arith.constant 0 : i32
    %c0_i32_0 = arith.constant 0 : i32
    return %c0_i32 : i32
  }
  func.func @transform_1(%arg0: i32) -> (i32, i32, i32) {
    %c0_i32 = arith.constant 0 : i32
    %c0_i32_0 = arith.constant 0 : i32
    %c0_i32_1 = arith.constant 0 : i32
    return %arg0, %c0_i32, %c0_i32_0 : i32, i32, i32
  }
  func.func @transform_2(%arg0: i32) -> (i32, i32, i32) {
    %c0_i32 = arith.constant 0 : i32
    %c0_i32_0 = arith.constant 0 : i32
    %c0_i32_1 = arith.constant 0 : i32
    return %arg0, %c0_i32, %c0_i32_0 : i32, i32, i32
  }
  func.func @transform_3(%arg0: i32) -> (i32, i32) {
    %c0_i32 = arith.constant 0 : i32
    %c0_i32_0 = arith.constant 0 : i32
    %c0_i32_1 = arith.constant 0 : i32
    return %c0_i32, %c0_i32_0 : i32, i32
  }
  func.func @transform_4(%arg0: i32) -> (i32, i32) {
    %c0_i32 = arith.constant 0 : i32
    %c0_i32_0 = arith.constant 0 : i32
    %c0_i32_1 = arith.constant 0 : i32
    return %c0_i32, %c0_i32_0 : i32, i32
  }
  func.func @transform_5(%arg0: i32) -> (i32, i32) {
    %c0_i32 = arith.constant 0 : i32
    %c0_i32_0 = arith.constant 0 : i32
    %c0_i32_1 = arith.constant 0 : i32
    return %c0_i32, %c0_i32_0 : i32, i32
  }
  func.func @transform_6(%arg0: i32) -> (i32, i32) {
    %c0_i32 = arith.constant 0 : i32
    %c0_i32_0 = arith.constant 0 : i32
    %c0_i32_1 = arith.constant 0 : i32
    return %c0_i32, %c0_i32_0 : i32, i32
  }
  func.func @transform_7(%arg0: i32) -> (i32, i32) {
    %c0_i32 = arith.constant 0 : i32
    %c0_i32_0 = arith.constant 0 : i32
    %c0_i32_1 = arith.constant 0 : i32
    return %c0_i32, %c0_i32_0 : i32, i32
  }
  func.func @transform_8(%arg0: i32) -> (i32, i32, i32) {
    %c0_i32 = arith.constant 0 : i32
    %c0_i32_0 = arith.constant 0 : i32
    %c0_i32_1 = arith.constant 0 : i32
    return %arg0, %c0_i32, %c0_i32_0 : i32, i32, i32
  }
  func.func @transform_9(%arg0: i32) -> (i32, i32, i32) {
    %c0_i32 = arith.constant 0 : i32
    %c0_i32_0 = arith.constant 0 : i32
    %c0_i32_1 = arith.constant 0 : i32
    return %arg0, %c0_i32, %c0_i32_0 : i32, i32, i32
  }
}

</mosaic_0001>

<llo_original>
// kernel: tpu_custom_call.1
$region0: #{tpu_custom_call.1}
  #allocation0 [shape = 'u32[]', space=smem, size = 0x4, offset = 0x4, fixed_abs, tag = 'smem constant byte address 0x4 - core index']
  #allocation1 [shape = 'u32[144,128]{1,0:T(1,128)}', space=vmem, size = 0x12000, scoped, tag = 'internal scratch']
  #allocation2 [shape = 'f32[1]{0:T(128)S(6)}', space=smem, size = 0x200, scoped, tag = 'scoped memory for tpu_custom_call.1']
  %s0 = inlined_call_operand.<no memory space> [shape: f32[1], index: 0, kind: input, shape index: {}]
  %s1 = inlined_call_operand.vmem [shape: f32[2,32,64], index: 1, kind: input, shape index: {}]
  %s2 = inlined_call_operand.hbm [shape: f32[2,32,64], index: 2, kind: input, shape index: {}]
  %s3 = inlined_call_operand.vmem [shape: bf16[4,32], index: 3, kind: input, shape index: {}]
  %s4 = inlined_call_operand.vmem [shape: f32[4,1], index: 4, kind: input, shape index: {}]
  %s5 = inlined_call_operand.vmem [shape: bf16[36,32], index: 5, kind: input, shape index: {}]
  %s6 = inlined_call_operand.vmem [shape: f32[36,1], index: 6, kind: input, shape index: {}]
  %s7 = inlined_call_operand.vmem [shape: f32[4,64], index: 7, kind: input, shape index: {}]
  %s8 = inlined_call_operand.hbm [shape: f32[2,32,64], index: 8, kind: output, shape index: {0}]
  %s9 = inlined_call_operand.hbm [shape: f32[2,64,64], index: 9, kind: output, shape index: {1}]
  %10 = xla_tuple %s8, %s9
  %s11 = sld [smem:[#allocation0]]
  $region77: #{tpu_custom_call.1} parent=0
    _
  %s13 = ssub.s32 1, %s11
  %s14 = scalar_select 0, %s13, %s11
  %15 = sst [smem:[#allocation2]] %s0
  $region1: #{tpu_custom_call.1} parent=0
    #allocation3 [shape = 'u8[32768]{0}', space=vmem, size = 0x8000, scoped, tag = 'input window, operand 2']
    #allocation4 [shape = 's32[2]{0}', space=sflag, size = 0x8, scoped, tag = 'scoped memory for tpu_custom_call.1']
    #allocation5 [shape = 's32[2]{0}', space=sflag, size = 0x8, scoped, tag = 'scoped memory for tpu_custom_call.1']
    #allocation6 [shape = 'u8[32768]{0}', space=vmem, size = 0x8000, scoped, tag = 'output window, operand 0']
    #allocation7 [shape = 'u8[65536]{0}', space=vmem, size = 0x10000, scoped, tag = 'output window, operand 1']
    #allocation8 [shape = 's32[2]{0}', space=sflag, size = 0x8, scoped, tag = 'scoped memory for tpu_custom_call.1']
    %16 = vsyncpa [#allocation4], 0
    %s17 = scalar_lea.sflag [#allocation4], 1
    %18 = vsyncpa %s17, 0
    %19 = vsyncpa [#allocation5], 0
    %s20 = scalar_lea.sflag [#allocation5], 1
    %21 = vsyncpa %s20, 0
    %22 = vsyncpa [#allocation8], 0
    %s23 = scalar_lea.sflag [#allocation8], 1
    %24 = vsyncpa %s23, 0
    loop: start=0, step=1, limit=4
    $region2: #{tpu_custom_call.1} parent=1 // loop_pre_header
      _
    $region3: #{tpu_custom_call.1} parent=1 // loop_header
      %s26 = sphi 0, %s30
      %p27 = scmp.ge.s32.totalorder %s26, 4
      %s34 = sphi 0, %s34
      %s36 = sphi 0, %s34
      %s37 = sphi 0, %s36
      %s51 = sphi 0, %s37
      %s57 = sphi 0, %s59
      %s60 = sphi 0, %s57
      %s61 = sphi 0, %s60
      %s77 = sphi 0, %s61
      %s83 = sphi 0, %s85
      %s86 = sphi 0, %s83
      %s87 = sphi 0, %s86
      %s103 = sphi 0, %s87
      %s107 = sphi 0, %s107
      %s109 = sphi 0, %s107
      %s110 = sphi 0, %s109
      %s124 = sphi 0, %s110
      %s128 = sphi 0, %s128
      %s130 = sphi 0, %s128
      %s131 = sphi 0, %s130
      %s145 = sphi 0, %s131
      %s149 = sphi 0, %s149
      %s151 = sphi 0, %s149
      %s152 = sphi 0, %s151
      %s166 = sphi 0, %s152
      %s170 = sphi 0, %s170
      %s172 = sphi 0, %s170
      %s173 = sphi 0, %s172
      %s187 = sphi 0, %s173
      %s191 = sphi 0, %s191
      %s193 = sphi 0, %s191
      %s194 = sphi 0, %s193
      %s208 = sphi 0, %s194
      %s214 = sphi 0, %s216
      %s217 = sphi 0, %s214
      %s218 = sphi 0, %s217
      %s234 = sphi 0, %s218
      %s240 = sphi 0, %s242
      %s243 = sphi 0, %s240
      %s244 = sphi 0, %s243
      %s260 = sphi 0, %s244
    $region4: #{tpu_custom_call.1} parent=1 // loop_header_branch
      %29 = sbr.rel (%p27) target = $region8
    $region5: #{tpu_custom_call.1} parent=1 // loop_body
      %s31 = ssub.s32 %s26, 1
      %s32 = ssub.s32 %s26, 2
      %s33 = sadd.s32 %s26, 1
      %s35 = sadd.s32 %s34, 1
      %p38 = scmp.eq.s32.totalorder %s26, 1
      %p39 = scmp.ne.s32.totalorder %s34, %s36
      %p40 = scmp.eq.s32.totalorder %s26, 0
      %p41 = por %p39, %p40
      %p42 = scmp.ne.s32.totalorder %s34, %s36
      %p43 = scmp.eq.s32.totalorder %s31, 1
      %p44 = por %p42, %p43
      %p45 = scmp.ne.s32.totalorder %s36, %s37
      %p46 = scmp.eq.s32.totalorder %s31, 0
      %p47 = por %p45, %p46
      %p48 = scmp.ne.s32.totalorder %s36, %s37
      %p49 = scmp.eq.s32.totalorder %s32, 1
      %p50 = por %p48, %p49
      %p52 = scmp.ne.s32.totalorder %s37, %s51
      %p53 = scmp.eq.s32.totalorder %s32, 0
      %p54 = por %p52, %p53
      %s55 = ssub.s32 %s26, %s33
      %p56 = scmp.eq.s32.totalorder %s55, 0
      %s58 = sadd.s32 %s57, 1
      %s59 = scalar_select %p56, %s57, %s58
      %p62 = pneg %p56
      %p63 = scmp.eq.s32.totalorder %s26, 1
      %p64 = por %p62, %p63
      %p65 = scmp.ne.s32.totalorder %s57, %s60
      %p66 = scmp.eq.s32.totalorder %s26, 0
      %p67 = por %p65, %p66
      %p68 = scmp.ne.s32.totalorder %s57, %s60
      %p69 = scmp.eq.s32.totalorder %s31, 1
      %p70 = por %p68, %p69
      %p71 = scmp.ne.s32.totalorder %s60, %s61
      %p72 = scmp.eq.s32.totalorder %s31, 0
      %p73 = por %p71, %p72
      %p74 = scmp.ne.s32.totalorder %s60, %s61
      %p75 = scmp.eq.s32.totalorder %s32, 1
      %p76 = por %p74, %p75
      %p78 = scmp.ne.s32.totalorder %s61, %s77
      %p79 = scmp.eq.s32.totalorder %s32, 0
      %p80 = por %p78, %p79
      %s81 = ssub.s32 %s26, %s33
      %p82 = scmp.eq.s32.totalorder %s81, 0
      %s84 = sadd.s32 %s83, 1
      %s85 = scalar_select %p82, %s83, %s84
      %p88 = pneg %p82
      %p89 = scmp.eq.s32.totalorder %s26, 1
      %p90 = por %p88, %p89
      %p91 = scmp.ne.s32.totalorder %s83, %s86
      %p92 = scmp.eq.s32.totalorder %s26, 0
      %p93 = por %p91, %p92
      %p94 = scmp.ne.s32.totalorder %s83, %s86
      %p95 = scmp.eq.s32.totalorder %s31, 1
      %p96 = por %p94, %p95
      %p97 = scmp.ne.s32.totalorder %s86, %s87
      %p98 = scmp.eq.s32.totalorder %s31, 0
      %p99 = por %p97, %p98
      %p100 = scmp.ne.s32.totalorder %s86, %s87
      %p101 = scmp.eq.s32.totalorder %s32, 1
      %p102 = por %p100, %p101
      %p104 = scmp.ne.s32.totalorder %s87, %s103
      %p105 = scmp.eq.s32.totalorder %s32, 0
      %p106 = por %p104, %p105
      %s108 = sadd.s32 %s107, 1
      %p111 = scmp.eq.s32.totalorder %s26, 1
      %p112 = scmp.ne.s32.totalorder %s107, %s109
      %p113 = scmp.eq.s32.totalorder %s26, 0
      %p114 = por %p112, %p113
      %p115 = scmp.ne.s32.totalorder %s107, %s109
      %p116 = scmp.eq.s32.totalorder %s31, 1
      %p117 = por %p115, %p116
      %p118 = scmp.ne.s32.totalorder %s109, %s110
      %p119 = scmp.eq.s32.totalorder %s31, 0
      %p120 = por %p118, %p119
      %p121 = scmp.ne.s32.totalorder %s109, %s110
      %p122 = scmp.eq.s32.totalorder %s32, 1
      %p123 = por %p121, %p122
      %p125 = scmp.ne.s32.totalorder %s110, %s124
      %p126 = scmp.eq.s32.totalorder %s32, 0
      %p127 = por %p125, %p126
      %s129 = sadd.s32 %s128, 1
      %p132 = scmp.eq.s32.totalorder %s26, 1
      %p133 = scmp.ne.s32.totalorder %s128, %s130
      %p134 = scmp.eq.s32.totalorder %s26, 0
      %p135 = por %p133, %p134
      %p136 = scmp.ne.s32.totalorder %s128, %s130
      %p137 = scmp.eq.s32.totalorder %s31, 1
      %p138 = por %p136, %p137
      %p139 = scmp.ne.s32.totalorder %s130, %s131
      %p140 = scmp.eq.s32.totalorder %s31, 0
      %p141 = por %p139, %p140
      %p142 = scmp.ne.s32.totalorder %s130, %s131
      %p143 = scmp.eq.s32.totalorder %s32, 1
      %p144 = por %p142, %p143
      %p146 = scmp.ne.s32.totalorder %s131, %s145
      %p147 = scmp.eq.s32.totalorder %s32, 0
      %p148 = por %p146, %p147
      %s150 = sadd.s32 %s149, 1
      %p153 = scmp.eq.s32.totalorder %s26, 1
      %p154 = scmp.ne.s32.totalorder %s149, %s151
      %p155 = scmp.eq.s32.totalorder %s26, 0
      %p156 = por %p154, %p155
      %p157 = scmp.ne.s32.totalorder %s149, %s151
      %p158 = scmp.eq.s32.totalorder %s31, 1
      %p159 = por %p157, %p158
      %p160 = scmp.ne.s32.totalorder %s151, %s152
      %p161 = scmp.eq.s32.totalorder %s31, 0
      %p162 = por %p160, %p161
      %p163 = scmp.ne.s32.totalorder %s151, %s152
      %p164 = scmp.eq.s32.totalorder %s32, 1
      %p165 = por %p163, %p164
      %p167 = scmp.ne.s32.totalorder %s152, %s166
      %p168 = scmp.eq.s32.totalorder %s32, 0
      %p169 = por %p167, %p168
      %s171 = sadd.s32 %s170, 1
      %p174 = scmp.eq.s32.totalorder %s26, 1
      %p175 = scmp.ne.s32.totalorder %s170, %s172
      %p176 = scmp.eq.s32.totalorder %s26, 0
      %p177 = por %p175, %p176
      %p178 = scmp.ne.s32.totalorder %s170, %s172
      %p179 = scmp.eq.s32.totalorder %s31, 1
      %p180 = por %p178, %p179
      %p181 = scmp.ne.s32.totalorder %s172, %s173
      %p182 = scmp.eq.s32.totalorder %s31, 0
      %p183 = por %p181, %p182
      %p184 = scmp.ne.s32.totalorder %s172, %s173
      %p185 = scmp.eq.s32.totalorder %s32, 1
      %p186 = por %p184, %p185
      %p188 = scmp.ne.s32.totalorder %s173, %s187
      %p189 = scmp.eq.s32.totalorder %s32, 0
      %p190 = por %p188, %p189
      %s192 = sadd.s32 %s191, 1
      %p195 = scmp.eq.s32.totalorder %s26, 1
      %p196 = scmp.ne.s32.totalorder %s191, %s193
      %p197 = scmp.eq.s32.totalorder %s26, 0
      %p198 = por %p196, %p197
      %p199 = scmp.ne.s32.totalorder %s191, %s193
      %p200 = scmp.eq.s32.totalorder %s31, 1
      %p201 = por %p199, %p200
      %p202 = scmp.ne.s32.totalorder %s193, %s194
      %p203 = scmp.eq.s32.totalorder %s31, 0
      %p204 = por %p202, %p203
      %p205 = scmp.ne.s32.totalorder %s193, %s194
      %p206 = scmp.eq.s32.totalorder %s32, 1
      %p207 = por %p205, %p206
      %p209 = scmp.ne.s32.totalorder %s194, %s208
      %p210 = scmp.eq.s32.totalorder %s32, 0
      %p211 = por %p209, %p210
      %s212 = ssub.s32 %s26, %s33
      %p213 = scmp.eq.s32.totalorder %s212, 0
      %s215 = sadd.s32 %s214, 1
      %s216 = scalar_select %p213, %s214, %s215
      %p219 = pneg %p213
      %p220 = scmp.eq.s32.totalorder %s26, 1
      %p221 = por %p219, %p220
      %p222 = scmp.ne.s32.totalorder %s214, %s217
      %p223 = scmp.eq.s32.totalorder %s26, 0
      %p224 = por %p222, %p223
      %p225 = scmp.ne.s32.totalorder %s214, %s217
      %p226 = scmp.eq.s32.totalorder %s31, 1
      %p227 = por %p225, %p226
      %p228 = scmp.ne.s32.totalorder %s217, %s218
      %p229 = scmp.eq.s32.totalorder %s31, 0
      %p230 = por %p228, %p229
      %p231 = scmp.ne.s32.totalorder %s217, %s218
      %p232 = scmp.eq.s32.totalorder %s32, 1
      %p233 = por %p231, %p232
      %p235 = scmp.ne.s32.totalorder %s218, %s234
      %p236 = scmp.eq.s32.totalorder %s32, 0
      %p237 = por %p235, %p236
      %s238 = ssub.s32 %s26, %s33
      %p239 = scmp.eq.s32.totalorder %s238, 0
      %s241 = sadd.s32 %s240, 1
      %s242 = scalar_select %p239, %s240, %s241
      %p245 = pneg %p239
      %p246 = scmp.eq.s32.totalorder %s26, 1
      %p247 = por %p245, %p246
      %p248 = scmp.ne.s32.totalorder %s240, %s243
      %p249 = scmp.eq.s32.totalorder %s26, 0
      %p250 = por %p248, %p249
      %p251 = scmp.ne.s32.totalorder %s240, %s243
      %p252 = scmp.eq.s32.totalorder %s31, 1
      %p253 = por %p251, %p252
      %p254 = scmp.ne.s32.totalorder %s243, %s244
      %p255 = scmp.eq.s32.totalorder %s31, 0
      %p256 = por %p254, %p255
      %p257 = scmp.ne.s32.totalorder %s243, %s244
      %p258 = scmp.eq.s32.totalorder %s32, 1
      %p259 = por %p257, %p258
      %p261 = scmp.ne.s32.totalorder %s244, %s260
      %p262 = scmp.eq.s32.totalorder %s32, 0
      %p263 = por %p261, %p262
      %p264 = scmp.le.s32.totalorder 1, %s26
      %p265 = scmp.lt.s32.totalorder %s26, 3
      %p266 = pnand %p264, %p265
      %p267 = pneg %p266
      // Predicated region
      $region9: #{tpu_custom_call.1} parent=5 // pred_check
        _
      $region10: #{tpu_custom_call.1} parent=5 // pred_check_branch
        %269 = sbr.rel (%p266) target = $region12
      $region11: #{tpu_custom_call.1} parent=5 // pred_region
        %s270 = ssub.s32 %s26, 1
        // Predicated region
        $region13: #{tpu_custom_call.1} parent=11 // pred_check
          %p271 = pneg %p47
        $region14: #{tpu_custom_call.1} parent=11 // pred_check_branch
          %273 = sbr.rel (%p271) target = $region16
        $region15: #{tpu_custom_call.1} parent=11 // pred_region
          _
        $region16: #{tpu_custom_call.1} parent=11 // pred_fallthru
          _
        // Predicated region
        $region17: #{tpu_custom_call.1} parent=11 // pred_check
          %p274 = pneg %p120
        $region18: #{tpu_custom_call.1} parent=11 // pred_check_branch
          %276 = sbr.rel (%p274) target = $region20
        $region19: #{tpu_custom_call.1} parent=11 // pred_region
          _
        $region20: #{tpu_custom_call.1} parent=11 // pred_fallthru
          _
        // Predicated region
        $region21: #{tpu_custom_call.1} parent=11 // pred_check
          %p277 = pneg %p141
        $region22: #{tpu_custom_call.1} parent=11 // pred_check_branch
          %279 = sbr.rel (%p277) target = $region24
        $region23: #{tpu_custom_call.1} parent=11 // pred_region
          _
        $region24: #{tpu_custom_call.1} parent=11 // pred_fallthru
          _
        // Predicated region
        $region25: #{tpu_custom_call.1} parent=11 // pred_check
          %p280 = pneg %p162
        $region26: #{tpu_custom_call.1} parent=11 // pred_check_branch
          %282 = sbr.rel (%p280) target = $region28
        $region27: #{tpu_custom_call.1} parent=11 // pred_region
          _
        $region28: #{tpu_custom_call.1} parent=11 // pred_fallthru
          _
        // Predicated region
        $region29: #{tpu_custom_call.1} parent=11 // pred_check
          %p283 = pneg %p183
        $region30: #{tpu_custom_call.1} parent=11 // pred_check_branch
          %285 = sbr.rel (%p283) target = $region32
        $region31: #{tpu_custom_call.1} parent=11 // pred_region
          _
        $region32: #{tpu_custom_call.1} parent=11 // pred_fallthru
          _
        // Predicated region
        $region33: #{tpu_custom_call.1} parent=11 // pred_check
          %p286 = pneg %p204
        $region34: #{tpu_custom_call.1} parent=11 // pred_check_branch
          %288 = sbr.rel (%p286) target = $region36
        $region35: #{tpu_custom_call.1} parent=11 // pred_region
          _
        $region36: #{tpu_custom_call.1} parent=11 // pred_fallthru
          _
      $region12: #{tpu_custom_call.1} parent=5 // pred_fallthru
        _
      %p289 = scmp.lt.s32.totalorder %s26, 2
      // Predicated region
      $region37: #{tpu_custom_call.1} parent=5 // pred_check
        %p290 = pneg %p289
      $region38: #{tpu_custom_call.1} parent=5 // pred_check_branch
        %292 = sbr.rel (%p290) target = $region40
      $region39: #{tpu_custom_call.1} parent=5 // pred_region
        // Predicated region
        $region41: #{tpu_custom_call.1} parent=39 // pred_check
          %p293 = pneg %p67
        $region42: #{tpu_custom_call.1} parent=39 // pred_check_branch
          %295 = sbr.rel (%p293) target = $region44
        $region43: #{tpu_custom_call.1} parent=39 // pred_region
          %p296 = scmp.lt.s32.totalorder %s26, 1
          %s297 = scalar_select %p296, %s26, 1
          %s298 = smul.addr %s297, 4
          %s299 = smul.addr %s298, 8
          %s300 = scalar_lea.vmem %s1, %s299
        $region44: #{tpu_custom_call.1} parent=39 // pred_fallthru
          _
        // Predicated region
        $region45: #{tpu_custom_call.1} parent=39 // pred_check
          %p301 = pneg %p93
        $region46: #{tpu_custom_call.1} parent=39 // pred_check_branch
          %303 = sbr.rel (%p301) target = $region48
        $region47: #{tpu_custom_call.1} parent=39 // pred_region
          %s304 = sand.u32 %s83, 1
          %s305 = scalar_lea.sflag [#allocation4], %s304
          %s306 = sand.u32 %s83, 1
          %s307 = smul.addr %s306, 32
          %s308 = scalar_lea.vmem [#allocation3], %s307
          %s310 = ssub.s32 512, 512
          %311 = vsyncadd %s305, %s310
          %s312 = smul.addr %s26, 4
          %s313 = smul.addr %s312, 128
          %s314 = scalar_lea.hbm %s2, %s313
          %s315 = sshll.u32 %s308, 4
          %s316 = int_to_ptr.vmem [resolvable:$true] %s315
          %321 = dma.hbm_to_vmem [thread:$0]  %s314, 512, %s316, %s305, 128, 128, 8
        $region48: #{tpu_custom_call.1} parent=39 // pred_fallthru
          _
      $region40: #{tpu_custom_call.1} parent=5 // pred_fallthru
        _
      %p322 = scmp.le.s32.totalorder 1, %s26
      %p323 = scmp.lt.s32.totalorder %s26, 3
      %p324 = pnand %p322, %p323
      %p325 = pneg %p324
      // Predicated region
      $region49: #{tpu_custom_call.1} parent=5 // pred_check
        _
      $region50: #{tpu_custom_call.1} parent=5 // pred_check_branch
        %327 = sbr.rel (%p324) target = $region52
      $region51: #{tpu_custom_call.1} parent=5 // pred_region
        %s328 = ssub.s32 %s26, 1
        %s329 = sand.u32 %s86, 1
        %s330 = scalar_lea.sflag [#allocation4], %s329
        %s331 = sand.u32 %s86, 1
        %s332 = smul.addr %s331, 32
        %s333 = scalar_lea.vmem [#allocation3], %s332
        // Predicated region
        $region53: #{tpu_custom_call.1} parent=51 // pred_check
          %p334 = pneg %p99
        $region54: #{tpu_custom_call.1} parent=51 // pred_check_branch
          %336 = sbr.rel (%p334) target = $region56
        $region55: #{tpu_custom_call.1} parent=51 // pred_region
          %337 = dma.done %s330, 512
        $region56: #{tpu_custom_call.1} parent=51 // pred_fallthru
          _
        %p338 = pneg %p47
        %p339 = pneg %p44
        %p340 = scmp.lt.s32.totalorder %s31, 1
        %s341 = scalar_select %p340, %s31, 1
        %s342 = smul.addr %s341, 4
        %s343 = smul.addr %s342, 8
        %s344 = scalar_lea.vmem %s1, %s343
        %p345 = pneg %p73
        %p346 = pneg %p70
        %s347 = sand.u32 %s86, 1
        %s348 = scalar_lea.sflag [#allocation4], %s347
        %s349 = sand.u32 %s86, 1
        %s350 = smul.addr %s349, 32
        %s351 = scalar_lea.vmem [#allocation3], %s350
        %p352 = pneg %p99
        %p353 = pneg %p96
        %p354 = pneg %p120
        %p355 = pneg %p117
        %p356 = pneg %p141
        %p357 = pneg %p138
        %p358 = pneg %p162
        %p359 = pneg %p159
        %p360 = pneg %p183
        %p361 = pneg %p180
        %p362 = pneg %p204
        %p363 = pneg %p201
        %p364 = pneg %p230
        %p365 = pneg %p227
        %s366 = sand.u32 %s217, 1
        %s367 = scalar_lea.sflag [#allocation5], %s366
        %s368 = sand.u32 %s217, 1
        %s369 = smul.addr %s368, 32
        %s370 = scalar_lea.vmem [#allocation6], %s369
        %p371 = pneg %p256
        %p372 = pneg %p253
        %s373 = sand.u32 %s243, 1
        %s374 = scalar_lea.sflag [#allocation8], %s373
        %s375 = sand.u32 %s243, 1
        %s376 = smul.addr %s375, 64
        %s377 = scalar_lea.vmem [#allocation7], %s376
        %p378 = scmp.lt.s32.totalorder %s31, 1
        %s379 = scalar_select %p378, %s31, 1
        %s380 = smul.addr %s379, 4
        %s381 = smul.addr %s380, 8
        %s382 = scalar_lea.vmem %s1, %s381
        %v384 = vld [vmem:[%s382] sm:$0xff]
        %v385 = vld [vmem:[%s382 + $0x8] sm:$0xff]
        %v386 = vld [vmem:[%s382 + $0x10] sm:$0xff]
        %v387 = vld [vmem:[%s382 + $0x18] sm:$0xff]
        %v388 = vpack.c.bf16 %v385, %v384
        %v389 = vpack.c.bf16 %v387, %v386
        %v390 = vld [vmem:[%s333] sm:$0xff]
        %v391 = vld [vmem:[%s333 + $0x8] sm:$0xff]
        %v392 = vld [vmem:[%s333 + $0x10] sm:$0xff]
        %v393 = vld [vmem:[%s333 + $0x18] sm:$0xff]
        %v394 = vpack.c.bf16 %v391, %v390
        %v395 = vpack.c.bf16 %v393, %v392
        %v396 = vld [vmem:[%s3] sm:$0x3]
        %v397 = vld [vmem:[%s4] sm:$0xf]
        %399 = vset.pattern.permute.xlu0 0
        %400 = vperm.xlu0 %399, %v397
        %v401 = vpop.permute.xlu0 %400
        %vm403 = vcmask 261120
        %v405 = vsel %vm403, %v396, 0
        %407 = vmatprep.subr.bf16.mxu0 0
        %408 = vmatpush1.bf16.msra.mxu0 %v388
        %409 = vmatprep.subr.bf16.mxu0 0
        %410 = vmatpush1.bf16.msra.mxu0 %v389
        %411 = vmatprep.subr.bf16.mxu0 0
        %412 = vmatpush1.bf16.msra.mxu0 0
        %413 = vmatprep.subr.bf16.mxu0 0
        %414 = vmatpush1.bf16.msra.mxu0 0
        %415 = vmatprep.subr.bf16.mxu0 0
        %416 = vmatpush1.bf16.msra.mxu0 0
        %417 = vmatprep.subr.bf16.mxu0 0
        %418 = vmatpush1.bf16.msra.mxu0 0
        %419 = vmatprep.subr.bf16.mxu0 0
        %420 = vmatpush1.bf16.msra.mxu0 0
        %421 = vmatprep.subr.bf16.mxu0 0
        %422 = vmatpush1.bf16.msra.mxu0 0
        %423 = vmatprep.subr.bf16.mxu0 0
        %424 = vmatpush1.bf16.msra.mxu0 0
        %425 = vmatprep.subr.bf16.mxu0 0
        %426 = vmatpush1.bf16.msra.mxu0 0
        %427 = vmatprep.subr.bf16.mxu0 0
        %428 = vmatpush1.bf16.msra.mxu0 0
        %429 = vmatprep.subr.bf16.mxu0 0
        %430 = vmatpush1.bf16.msra.mxu0 0
        %431 = vmatprep.subr.bf16.mxu0 0
        %432 = vmatpush1.bf16.msra.mxu0 0
        %433 = vmatprep.subr.bf16.mxu0 0
        %434 = vmatpush1.bf16.msra.mxu0 0
        %435 = vmatprep.subr.bf16.mxu0 0
        %436 = vmatpush1.bf16.msra.mxu0 0
        %437 = vmatprep.subr.bf16.mxu0 0
        %438 = vmatpush1.bf16.msra.mxu0 0
        %439 = vmatprep.mubr.bf16.mxu0 0
        %440 = vmatmul.mubr.bf16.gmra.mrb[0].mxu0 %v405
        %v441 = vpop.f32.mrb[0].mxu0
        %v442 = vadd.f32 %v401, %v441
        %v443 = vpop.f32.mrb[0].mxu0
        %v444 = vpop.f32.mrb[0].mxu0
        %v445 = vpop.f32.mrb[0].mxu0
        %446 = vdwg.mxu0
        %v447 = vld [vmem:[%s5] sm:$0xf]
        %v448 = vld [vmem:[%s5 + $0x4] sm:$0xf]
        %v449 = vld [vmem:[%s5 + $0x8] sm:$0xf]
        %v450 = vld [vmem:[%s5 + $0xc] sm:$0xf]
        %v451 = vld [vmem:[%s5 + $0x10] sm:$0x3]
        %v452 = vld [vmem:[%s6] sm:$0xff]
        %v453 = vld [vmem:[%s6 + $0x8] sm:$0xff]
        %v454 = vld [vmem:[%s6 + $0x10] sm:$0xff]
        %v455 = vld [vmem:[%s6 + $0x18] sm:$0xff]
        %v456 = vld [vmem:[%s6 + $0x20] sm:$0xf]
        %458 = vset.pattern.permute.xlu0 0
        %459 = vperm.xlu0 %458, %v452
        %v460 = vpop.permute.xlu0 %459
        %463 = vset.pattern.permute.xlu0 0
        %464 = vperm.xlu0 %463, %v453
        %v465 = vpop.permute.xlu0 %464
        %468 = vset.pattern.permute.xlu0 0
        %469 = vperm.xlu0 %468, %v454
        %v470 = vpop.permute.xlu0 %469
        %473 = vset.pattern.permute.xlu0 0
        %474 = vperm.xlu0 %473, %v455
        %v475 = vpop.permute.xlu0 %474
        %478 = vset.pattern.permute.xlu0 0
        %479 = vperm.xlu0 %478, %v456
        %v480 = vpop.permute.xlu0 %479
        %v487 = vunpack.c.l.b16 %v447
        %v488 = vunpack.c.l.b16 %v448
        %v489 = vunpack.c.l.b16 %v449
        %v490 = vunpack.c.l.b16 %v450
        %v491 = vunpack.c.l.b16 %v451
        %v492 = vpack.c.b16 %v488, %v487
        %v493 = vpack.c.b16 %v490, %v489
        %v494 = vpack.c.b16 %v491, %v491
        %v496 = vsel %vm403, %v492, 0
        %v499 = vsel %vm403, %v493, 0
        %v502 = vsel %vm403, %v494, 0
        %504 = vmatprep.subr.bf16.mxu0 0
        %505 = vmatpush1.bf16.msra.mxu0 %v394
        %506 = vmatprep.subr.bf16.mxu0 0
        %507 = vmatpush1.bf16.msra.mxu0 %v395
        %508 = vmatprep.subr.bf16.mxu0 0
        %509 = vmatpush1.bf16.msra.mxu0 0
        %510 = vmatprep.subr.bf16.mxu0 0
        %511 = vmatpush1.bf16.msra.mxu0 0
        %512 = vmatprep.subr.bf16.mxu0 0
        %513 = vmatpush1.bf16.msra.mxu0 0
        %514 = vmatprep.subr.bf16.mxu0 0
        %515 = vmatpush1.bf16.msra.mxu0 0
        %516 = vmatprep.subr.bf16.mxu0 0
        %517 = vmatpush1.bf16.msra.mxu0 0
        %518 = vmatprep.subr.bf16.mxu0 0
        %519 = vmatpush1.bf16.msra.mxu0 0
        %520 = vmatprep.subr.bf16.mxu0 0
        %521 = vmatpush1.bf16.msra.mxu0 0
        %522 = vmatprep.subr.bf16.mxu0 0
        %523 = vmatpush1.bf16.msra.mxu0 0
        %524 = vmatprep.subr.bf16.mxu0 0
        %525 = vmatpush1.bf16.msra.mxu0 0
        %526 = vmatprep.subr.bf16.mxu0 0
        %527 = vmatpush1.bf16.msra.mxu0 0
        %528 = vmatprep.subr.bf16.mxu0 0
        %529 = vmatpush1.bf16.msra.mxu0 0
        %530 = vmatprep.subr.bf16.mxu0 0
        %531 = vmatpush1.bf16.msra.mxu0 0
        %532 = vmatprep.subr.bf16.mxu0 0
        %533 = vmatpush1.bf16.msra.mxu0 0
        %534 = vmatprep.subr.bf16.mxu0 0
        %535 = vmatpush1.bf16.msra.mxu0 0
        %536 = vmatprep.mubr.bf16.mxu0 0
        %537 = vmatmul.mubr.bf16.gmra.mrb[0].mxu0 %v496
        %v538 = vpop.f32.mrb[0].mxu0
        %v539 = vadd.f32 %v460, %v538
        %v540 = vpop.f32.mrb[0].mxu0
        %v541 = vpop.f32.mrb[0].mxu0
        %v542 = vadd.f32 %v465, %v541
        %v543 = vpop.f32.mrb[0].mxu0
        %544 = vmatprep.mubr.bf16.mxu0 0
        %545 = vmatmul.mubr.bf16.gmra.mrb[0].mxu0 %v499
        %v546 = vpop.f32.mrb[0].mxu0
        %v547 = vadd.f32 %v470, %v546
        %v548 = vpop.f32.mrb[0].mxu0
        %v549 = vpop.f32.mrb[0].mxu0
        %v550 = vadd.f32 %v475, %v549
        %v551 = vpop.f32.mrb[0].mxu0
        %552 = vmatprep.mubr.bf16.mxu0 0
        %553 = vmatmul.mubr.bf16.gmra.mrb[0].mxu0 %v502
        %v554 = vpop.f32.mrb[0].mxu0
        %v555 = vadd.f32 %v480, %v554
        %v556 = vpop.f32.mrb[0].mxu0
        %v557 = vpop.f32.mrb[0].mxu0
        %v558 = vpop.f32.mrb[0].mxu0
        %559 = vdwg.mxu0
        %v560 = vld [vmem:[%s7] sm:$0xf]
        %v561 = vadd.f32 %v555, %v560
        %562 = vxpose.xlu0.b32.start [1/16] %v442, 128
        %563 = vxpose.xlu0.b32.cont [2/16] 0.0, 128
        %564 = vxpose.xlu0.b32.cont [3/16] 0.0, 128
        %565 = vxpose.xlu0.b32.cont [4/16] 0.0, 128
        %566 = vxpose.xlu0.b32.cont [5/16] 0.0, 128
        %567 = vxpose.xlu0.b32.cont [6/16] 0.0, 128
        %568 = vxpose.xlu0.b32.cont [7/16] 0.0, 128
        %569 = vxpose.xlu0.b32.cont [8/16] 0.0, 128
        %570 = vxpose.xlu0.b32.cont [9/16] 0.0, 128
        %571 = vxpose.xlu0.b32.cont [10/16] 0.0, 128
        %572 = vxpose.xlu0.b32.cont [11/16] 0.0, 128
        %573 = vxpose.xlu0.b32.cont [12/16] 0.0, 128
        %574 = vxpose.xlu0.b32.cont [13/16] 0.0, 128
        %575 = vxpose.xlu0.b32.cont [14/16] 0.0, 128
        %576 = vxpose.xlu0.b32.cont [15/16] 0.0, 128
        %577 = vxpose.xlu0.b32.end [16/16] 0.0, 128
        %v578 = vpop.trf.xlu0
        %v579 = vpop.trf.xlu0
        %v580 = vpop.trf.xlu0
        %v581 = vpop.trf.xlu0
        %v582 = vpop.trf.xlu0
        %v583 = vpop.trf.xlu0
        %v584 = vpop.trf.xlu0
        %v585 = vpop.trf.xlu0
        %v586 = vpop.trf.xlu0
        %v587 = vpop.trf.xlu0
        %v588 = vpop.trf.xlu0
        %v589 = vpop.trf.xlu0
        %v590 = vpop.trf.xlu0
        %v591 = vpop.trf.xlu0
        %v592 = vpop.trf.xlu0
        %v593 = vpop.trf.xlu0
        %vm594 = vcmask 31744
        %v596 = vsel %vm594, %v578, 0
        %v599 = vsel %vm594, %v579, 0
        %v602 = vsel %vm594, %v580, 0
        %v605 = vsel %vm594, %v581, 0
        %v608 = vsel %vm594, %v582, 0
        %v611 = vsel %vm594, %v583, 0
        %v614 = vsel %vm594, %v584, 0
        %v617 = vsel %vm594, %v585, 0
        %vm619 = vcmask 1043456
        %v621 = vsel %vm619, %v561, 0
        %623 = vmatprep.subr.mxu0 0.0
        %624 = vmatpush1.msra.mxu0 %v621
        %625 = vmatprep.subr.mxu0 0.0
        %626 = vmatpush1.msra.mxu0 0.0
        %627 = vmatprep.subr.mxu0 0.0
        %628 = vmatpush1.msra.mxu0 0.0
        %629 = vmatprep.subr.mxu0 0.0
        %630 = vmatpush1.msra.mxu0 0.0
        %631 = vmatprep.subr.mxu0 0.0
        %632 = vmatpush1.msra.mxu0 0.0
        %633 = vmatprep.subr.mxu0 0.0
        %634 = vmatpush1.msra.mxu0 0.0
        %635 = vmatprep.subr.mxu0 0.0
        %636 = vmatpush1.msra.mxu0 0.0
        %637 = vmatprep.subr.mxu0 0.0
        %638 = vmatpush1.msra.mxu0 0.0
        %639 = vmatprep.subr.mxu0 0.0
        %640 = vmatpush1.msra.mxu0 0.0
        %641 = vmatprep.subr.mxu0 0.0
        %642 = vmatpush1.msra.mxu0 0.0
        %643 = vmatprep.subr.mxu0 0.0
        %644 = vmatpush1.msra.mxu0 0.0
        %645 = vmatprep.subr.mxu0 0.0
        %646 = vmatpush1.msra.mxu0 0.0
        %647 = vmatprep.subr.mxu0 0.0
        %648 = vmatpush1.msra.mxu0 0.0
        %649 = vmatprep.subr.mxu0 0.0
        %650 = vmatpush1.msra.mxu0 0.0
        %651 = vmatprep.subr.mxu0 0.0
        %652 = vmatpush1.msra.mxu0 0.0
        %653 = vmatprep.subr.mxu0 0.0
        %654 = vmatpush1.msra.mxu0 0.0
        %655 = vmatprep.subr.mxu0 0.0
        %656 = vmatpush1.msra.mxu0 0.0
        %657 = vmatprep.subr.mxu0 0.0
        %658 = vmatpush1.msra.mxu0 0.0
        %659 = vmatprep.subr.mxu0 0.0
        %660 = vmatpush1.msra.mxu0 0.0
        %661 = vmatprep.subr.mxu0 0.0
        %662 = vmatpush1.msra.mxu0 0.0
        %663 = vmatprep.subr.mxu0 0.0
        %664 = vmatpush1.msra.mxu0 0.0
        %665 = vmatprep.subr.mxu0 0.0
        %666 = vmatpush1.msra.mxu0 0.0
        %667 = vmatprep.subr.mxu0 0.0
        %668 = vmatpush1.msra.mxu0 0.0
        %669 = vmatprep.subr.mxu0 0.0
        %670 = vmatpush1.msra.mxu0 0.0
        %671 = vmatprep.subr.mxu0 0.0
        %672 = vmatpush1.msra.mxu0 0.0
        %673 = vmatprep.subr.mxu0 0.0
        %674 = vmatpush1.msra.mxu0 0.0
        %675 = vmatprep.subr.mxu0 0.0
        %676 = vmatpush1.msra.mxu0 0.0
        %677 = vmatprep.subr.mxu0 0.0
        %678 = vmatpush1.msra.mxu0 0.0
        %679 = vmatprep.subr.mxu0 0.0
        %680 = vmatpush1.msra.mxu0 0.0
        %681 = vmatprep.subr.mxu0 0.0
        %682 = vmatpush1.msra.mxu0 0.0
        %683 = vmatprep.subr.mxu0 0.0
        %684 = vmatpush1.msra.mxu0 0.0
        %685 = vmatprep.subr.mxu0 0.0
        %686 = vmatpush1.msra.mxu0 0.0
        %687 = vmatprep.mubr.f32.mxu0 0.0
        %688 = vmatmul.mubr.f32.gmra.mrb[0].mxu0 %v596
        %v689 = vpop.f32.mrb[0].mxu0
        %v690 = vadd.f32 0.0, %v689
        %v691 = vpop.f32.mrb[0].mxu0
        %692 = vmatprep.mubr.f32.mxu0 0.0
        %693 = vmatmul.mubr.f32.gmra.mrb[0].mxu0 %v599
        %v694 = vpop.f32.mrb[0].mxu0
        %v695 = vadd.f32 0.0, %v694
        %v696 = vpop.f32.mrb[0].mxu0
        %697 = vmatprep.mubr.f32.mxu0 0.0
        %698 = vmatmul.mubr.f32.gmra.mrb[0].mxu0 %v602
        %v699 = vpop.f32.mrb[0].mxu0
        %v700 = vadd.f32 0.0, %v699
        %v701 = vpop.f32.mrb[0].mxu0
        %702 = vmatprep.mubr.f32.mxu0 0.0
        %703 = vmatmul.mubr.f32.gmra.mrb[0].mxu0 %v605
        %v704 = vpop.f32.mrb[0].mxu0
        %v705 = vadd.f32 0.0, %v704
        %v706 = vpop.f32.mrb[0].mxu0
        %707 = vmatprep.mubr.f32.mxu0 0.0
        %708 = vmatmul.mubr.f32.gmra.mrb[0].mxu0 %v608
        %v709 = vpop.f32.mrb[0].mxu0
        %v710 = vadd.f32 0.0, %v709
        %v711 = vpop.f32.mrb[0].mxu0
        %712 = vmatprep.mubr.f32.mxu0 0.0
        %713 = vmatmul.mubr.f32.gmra.mrb[0].mxu0 %v611
        %v714 = vpop.f32.mrb[0].mxu0
        %v715 = vadd.f32 0.0, %v714
        %v716 = vpop.f32.mrb[0].mxu0
        %717 = vmatprep.mubr.f32.mxu0 0.0
        %718 = vmatmul.mubr.f32.gmra.mrb[0].mxu0 %v614
        %v719 = vpop.f32.mrb[0].mxu0
        %v720 = vadd.f32 0.0, %v719
        %v721 = vpop.f32.mrb[0].mxu0
        %722 = vmatprep.mubr.f32.mxu0 0.0
        %723 = vmatmul.mubr.f32.gmra.mrb[0].mxu0 %v617
        %v724 = vpop.f32.mrb[0].mxu0
        %v725 = vadd.f32 0.0, %v724
        %v726 = vpop.f32.mrb[0].mxu0
        %727 = vdwg.mxu0
        %vm728 = vcmask 523264
        %v729 = vsel %vm728, %v690, -inf
        %730 = vmax.xlane.f32.xlu0 %v729
        %v731 = vpop.xlane.xlu0 %730
        %v732 = vsel %vm728, %v695, -inf
        %733 = vmax.xlane.f32.xlu0 %v732
        %v734 = vpop.xlane.xlu0 %733
        %v735 = vsel %vm728, %v700, -inf
        %736 = vmax.xlane.f32.xlu0 %v735
        %v737 = vpop.xlane.xlu0 %736
        %v738 = vsel %vm728, %v705, -inf
        %739 = vmax.xlane.f32.xlu0 %v738
        %v740 = vpop.xlane.xlu0 %739
        %v741 = vsel %vm728, %v710, -inf
        %742 = vmax.xlane.f32.xlu0 %v741
        %v743 = vpop.xlane.xlu0 %742
        %v744 = vsel %vm728, %v715, -inf
        %745 = vmax.xlane.f32.xlu0 %v744
        %v746 = vpop.xlane.xlu0 %745
        %v747 = vsel %vm728, %v720, -inf
        %748 = vmax.xlane.f32.xlu0 %v747
        %v749 = vpop.xlane.xlu0 %748
        %v750 = vsel %vm728, %v725, -inf
        %751 = vmax.xlane.f32.xlu0 %v750
        %v752 = vpop.xlane.xlu0 %751
        %v753 = vsub.f32 %v690, %v731
        %v754 = vsub.f32 %v695, %v734
        %v755 = vsub.f32 %v700, %v737
        %v756 = vsub.f32 %v705, %v740
        %v757 = vsub.f32 %v710, %v743
        %v758 = vsub.f32 %v715, %v746
        %v759 = vsub.f32 %v720, %v749
        %v760 = vsub.f32 %v725, %v752
        %v761 = vmul.f32 %v753, 1.442695
        %v762 = vpow.pop %v761
        %v763 = vmul.f32 %v754, 1.442695
        %v764 = vpow.pop %v763
        %v765 = vmul.f32 %v755, 1.442695
        %v766 = vpow.pop %v765
        %v767 = vmul.f32 %v756, 1.442695
        %v768 = vpow.pop %v767
        %v769 = vmul.f32 %v757, 1.442695
        %v770 = vpow.pop %v769
        %v771 = vmul.f32 %v758, 1.442695
        %v772 = vpow.pop %v771
        %v773 = vmul.f32 %v759, 1.442695
        %v774 = vpow.pop %v773
        %v775 = vmul.f32 %v760, 1.442695
        %v776 = vpow.pop %v775
        %v777 = vsel %vm728, %v762, 0.0
        %778 = vadd.xlane.f32.xlu0 %v777
        %v779 = vpop.xlane.xlu0 %778
        %v780 = vsel %vm728, %v764, 0.0
        %781 = vadd.xlane.f32.xlu0 %v780
        %v782 = vpop.xlane.xlu0 %781
        %v783 = vsel %vm728, %v766, 0.0
        %784 = vadd.xlane.f32.xlu0 %v783
        %v785 = vpop.xlane.xlu0 %784
        %v786 = vsel %vm728, %v768, 0.0
        %787 = vadd.xlane.f32.xlu0 %v786
        %v788 = vpop.xlane.xlu0 %787
        %v789 = vsel %vm728, %v770, 0.0
        %790 = vadd.xlane.f32.xlu0 %v789
        %v791 = vpop.xlane.xlu0 %790
        %v792 = vsel %vm728, %v772, 0.0
        %793 = vadd.xlane.f32.xlu0 %v792
        %v794 = vpop.xlane.xlu0 %793
        %v795 = vsel %vm728, %v774, 0.0
        %796 = vadd.xlane.f32.xlu0 %v795
        %v797 = vpop.xlane.xlu0 %796
        %v798 = vsel %vm728, %v776, 0.0
        %799 = vadd.xlane.f32.xlu0 %v798
        %v800 = vpop.xlane.xlu0 %799
        %v801 = vrcp.pop %v779
        %v802 = vrcp.pop %v782
        %v803 = vrcp.pop %v785
        %v804 = vrcp.pop %v788
        %v805 = vrcp.pop %v791
        %v806 = vrcp.pop %v794
        %v807 = vrcp.pop %v797
        %v808 = vrcp.pop %v800
        %v809 = vmul.f32 %v762, %v801
        %v810 = vmul.f32 %v764, %v802
        %v811 = vmul.f32 %v766, %v803
        %v812 = vmul.f32 %v768, %v804
        %v813 = vmul.f32 %v770, %v805
        %v814 = vmul.f32 %v772, %v806
        %v815 = vmul.f32 %v774, %v807
        %v816 = vmul.f32 %v776, %v808
        %v817 = vpack.c.bf16 %v542, %v539
        %v818 = vpack.c.bf16 %v550, %v547
        %v819 = vpack.c.bf16 %v810, %v809
        %v820 = vpack.c.bf16 %v812, %v811
        %v821 = vpack.c.bf16 %v814, %v813
        %v822 = vpack.c.bf16 %v816, %v815
        %v824 = vsel %vm728, %v817, 0
        %v827 = vsel %vm728, %v818, 0
        %v830 = vsel %vm728, %v819, 0
        %v833 = vsel %vm728, %v820, 0
        %v836 = vsel %vm728, %v821, 0
        %v839 = vsel %vm728, %v822, 0
        %841 = vmatprep.subr.bf16.mxu0 0
        %842 = vmatpush1.bf16.xpose.msra.mxu0 %v830
        %843 = vmatprep.subr.bf16.mxu0 0
        %844 = vmatpush1.bf16.xpose.msra.mxu0 %v833
        %845 = vmatprep.subr.bf16.mxu0 0
        %846 = vmatpush1.bf16.xpose.msra.mxu0 %v836
        %847 = vmatprep.subr.bf16.mxu0 0
        %848 = vmatpush1.bf16.xpose.msra.mxu0 %v839
        %849 = vmatprep.subr.bf16.mxu0 0
        %850 = vmatpush1.bf16.xpose.msra.mxu0 0
        %851 = vmatprep.subr.bf16.mxu0 0
        %852 = vmatpush1.bf16.xpose.msra.mxu0 0
        %853 = vmatprep.subr.bf16.mxu0 0
        %854 = vmatpush1.bf16.xpose.msra.mxu0 0
        %855 = vmatprep.subr.bf16.mxu0 0
        %856 = vmatpush1.bf16.xpose.msra.mxu0 0
        %857 = vmatprep.subr.bf16.mxu0 0
        %858 = vmatpush1.bf16.xpose.msra.mxu0 0
        %859 = vmatprep.subr.bf16.mxu0 0
        %860 = vmatpush1.bf16.xpose.msra.mxu0 0
        %861 = vmatprep.subr.bf16.mxu0 0
        %862 = vmatpush1.bf16.xpose.msra.mxu0 0
        %863 = vmatprep.subr.bf16.mxu0 0
        %864 = vmatpush1.bf16.xpose.msra.mxu0 0
        %865 = vmatprep.subr.bf16.mxu0 0
        %866 = vmatpush1.bf16.xpose.msra.mxu0 0
        %867 = vmatprep.subr.bf16.mxu0 0
        %868 = vmatpush1.bf16.xpose.msra.mxu0 0
        %869 = vmatprep.subr.bf16.mxu0 0
        %870 = vmatpush1.bf16.xpose.msra.mxu0 0
        %871 = vmatprep.subr.bf16.mxu0 0
        %872 = vmatpush1.bf16.xpose.msra.mxu0 0
        %873 = vmatprep.mubr.bf16.mxu0 0
        %874 = vmatmul.mubr.bf16.gmra.mrb[0].mxu0 %v824
        %v875 = vpop.f32.mrb[0].mxu0
        %v876 = vadd.f32 0.0, %v875
        %v877 = vpop.f32.mrb[0].mxu0
        %v878 = vpop.f32.mrb[0].mxu0
        %v879 = vadd.f32 0.0, %v878
        %v880 = vpop.f32.mrb[0].mxu0
        %881 = vmatprep.mubr.bf16.mxu0 0
        %882 = vmatmul.mubr.bf16.gmra.mrb[0].mxu0 %v827
        %v883 = vpop.f32.mrb[0].mxu0
        %v884 = vadd.f32 0.0, %v883
        %v885 = vpop.f32.mrb[0].mxu0
        %v886 = vpop.f32.mrb[0].mxu0
        %v887 = vadd.f32 0.0, %v886
        %v888 = vpop.f32.mrb[0].mxu0
        %889 = vdwg.mxu0
        %s890 = sld [smem:[#allocation2]]
        %v891 = vstv %s890
        %v892 = vmul.f32 %v891, %v876
        %v893 = vmul.f32 %v891, %v879
        %v894 = vmul.f32 %v891, %v884
        %v895 = vmul.f32 %v891, %v887
        %v896 = vadd.f32 %v892, %v384
        %v897 = vadd.f32 %v893, %v385
        %v898 = vadd.f32 %v894, %v386
        %v899 = vadd.f32 %v895, %v387
        %900 = vst.msk [vmem:[%s370] sm:$0xff] %vm728, %v896
        %901 = vst.msk [vmem:[%s370 + $0x8] sm:$0xff] %vm728, %v897
        %902 = vst.msk [vmem:[%s370 + $0x10] sm:$0xff] %vm728, %v898
        %903 = vst.msk [vmem:[%s370 + $0x18] sm:$0xff] %vm728, %v899
        %904 = vst.msk [vmem:[%s377] sm:$0xff] %vm728, %v809
        %905 = vst.msk [vmem:[%s377 + $0x8] sm:$0xff] %vm728, %v810
        %906 = vst.msk [vmem:[%s377 + $0x10] sm:$0xff] %vm728, %v811
        %907 = vst.msk [vmem:[%s377 + $0x18] sm:$0xff] %vm728, %v812
        %908 = vst.msk [vmem:[%s377 + $0x20] sm:$0xff] %vm728, %v813
        %909 = vst.msk [vmem:[%s377 + $0x28] sm:$0xff] %vm728, %v814
        %910 = vst.msk [vmem:[%s377 + $0x30] sm:$0xff] %vm728, %v815
        %911 = vst.msk [vmem:[%s377 + $0x38] sm:$0xff] %vm728, %v816
        %s912 = sand.u32 %s217, 1
        %s913 = scalar_lea.sflag [#allocation5], %s912
        %s914 = sand.u32 %s217, 1
        %s915 = smul.addr %s914, 32
        %s916 = scalar_lea.vmem [#allocation6], %s915
        %s917 = sand.u32 %s243, 1
        %s918 = scalar_lea.sflag [#allocation8], %s917
        %s919 = sand.u32 %s243, 1
        %s920 = smul.addr %s919, 64
        %s921 = scalar_lea.vmem [#allocation7], %s920
        // Predicated region
        $region57: #{tpu_custom_call.1} parent=51 // pred_check
          %p922 = pneg %p227
        $region58: #{tpu_custom_call.1} parent=51 // pred_check_branch
          %924 = sbr.rel (%p922) target = $region60
        $region59: #{tpu_custom_call.1} parent=51 // pred_region
          %s926 = ssub.s32 512, 512
          %927 = vsyncadd %s913, %s926
          %s928 = smul.addr %s31, 4
          %s929 = smul.addr %s928, 128
          %s930 = scalar_lea.hbm %s8, %s929
          %s931 = sshll.u32 %s916, 4
          %s932 = int_to_ptr.vmem [resolvable:$true] %s931
          %937 = dma.vmem_to_hbm [thread:$0]  %s932, 512, %s930, %s913, 128, 128, 8
        $region60: #{tpu_custom_call.1} parent=51 // pred_fallthru
          _
        // Predicated region
        $region61: #{tpu_custom_call.1} parent=51 // pred_check
          %p938 = pneg %p253
        $region62: #{tpu_custom_call.1} parent=51 // pred_check_branch
          %940 = sbr.rel (%p938) target = $region64
        $region63: #{tpu_custom_call.1} parent=51 // pred_region
          %s942 = ssub.s32 1024, 1024
          %943 = vsyncadd %s918, %s942
          %s944 = smul.addr %s31, 8
          %s945 = smul.addr %s944, 128
          %s946 = scalar_lea.hbm %s9, %s945
          %s947 = sshll.u32 %s921, 4
          %s948 = int_to_ptr.vmem [resolvable:$true] %s947
          %953 = dma.vmem_to_hbm [thread:$0]  %s948, 1024, %s946, %s918, 128, 128, 8
        $region64: #{tpu_custom_call.1} parent=51 // pred_fallthru
          _
      $region52: #{tpu_custom_call.1} parent=5 // pred_fallthru
        _
      %p954 = scmp.le.s32.totalorder 2, %s26
      // Predicated region
      $region65: #{tpu_custom_call.1} parent=5 // pred_check
        %p955 = pneg %p954
      $region66: #{tpu_custom_call.1} parent=5 // pred_check_branch
        %957 = sbr.rel (%p955) target = $region68
      $region67: #{tpu_custom_call.1} parent=5 // pred_region
        %s958 = ssub.s32 %s26, 2
        // Predicated region
        $region69: #{tpu_custom_call.1} parent=67 // pred_check
          %p959 = pneg %p233
        $region70: #{tpu_custom_call.1} parent=67 // pred_check_branch
          %961 = sbr.rel (%p959) target = $region72
        $region71: #{tpu_custom_call.1} parent=67 // pred_region
          %s962 = sand.u32 %s218, 1
          %s963 = scalar_lea.sflag [#allocation5], %s962
          %s964 = sand.u32 %s218, 1
          %s965 = smul.addr %s964, 32
          %s966 = scalar_lea.vmem [#allocation6], %s965
          %967 = dma.done %s963, 512
        $region72: #{tpu_custom_call.1} parent=67 // pred_fallthru
          _
        // Predicated region
        $region73: #{tpu_custom_call.1} parent=67 // pred_check
          %p968 = pneg %p259
        $region74: #{tpu_custom_call.1} parent=67 // pred_check_branch
          %970 = sbr.rel (%p968) target = $region76
        $region75: #{tpu_custom_call.1} parent=67 // pred_region
          %s971 = sand.u32 %s244, 1
          %s972 = scalar_lea.sflag [#allocation8], %s971
          %s973 = sand.u32 %s244, 1
          %s974 = smul.addr %s973, 64
          %s975 = scalar_lea.vmem [#allocation7], %s974
          %976 = dma.done %s972, 1024
        $region76: #{tpu_custom_call.1} parent=67 // pred_fallthru
          _
      $region68: #{tpu_custom_call.1} parent=5 // pred_fallthru
        _
    $region6: #{tpu_custom_call.1} parent=1 // loop_footer
      %s30 = sadd.s32 1, %s26
    $region7: #{tpu_custom_call.1} parent=1 // loop_footer_branch
      %25 = sbr.rel target = $region3
    $region8: #{tpu_custom_call.1} parent=1 // loop_exit
      _
    %977 = vsyncpa [#allocation4], 1
    %s978 = scalar_lea.sflag [#allocation4], 1
    %979 = vsyncpa %s978, 1
    %980 = vsyncpa [#allocation5], 1
    %s981 = scalar_lea.sflag [#allocation5], 1
    %982 = vsyncpa %s981, 1
    %983 = vsyncpa [#allocation8], 1
    %s984 = scalar_lea.sflag [#allocation8], 1
    %985 = vsyncpa %s984, 1

</llo_original>
